<compile_context>
chip_gen: v7x
topology: tpu7x:2x2x1
jax: 0.10.0
libtpu: 0.0.40
codegen_flags: <defaults>
</compile_context>

<pallas_src>
import jax
import jax.numpy as jnp
from jax.experimental import pallas as pl
from jax.experimental.pallas import tpu as pltpu


def fm_kernel(w0_ref, w1_ref, w2t_ref, w2t_sq_ref, xt_ref, o_ref):
    xt = xt_ref[...]                       # (F, tb)   batch on lanes
    w1 = w1_ref[...]                       # (F, 1)    broadcasts along lanes
    w0 = w0_ref[0]                         # scalar bias from SMEM

    # First order: w0 + w1^T x  (VPU multiply + sublane reduce, no N=1 matmul)
    first = jnp.sum(xt * w1, axis=0, keepdims=True) + w0             # (1, tb)

    # Second order: 0.5 * sum_l [ (w2^T x)^2 - (w2^2)^T x^2 ]
    xw2 = jnp.dot(w2t_ref[...], xt,
                  preferred_element_type=jnp.float32)                # (L, tb)
    x2w2sq = jnp.dot(w2t_sq_ref[...], xt * xt,
                     preferred_element_type=jnp.float32)             # (L, tb)
    second = 0.5 * jnp.sum(xw2 * xw2 - x2w2sq, axis=0, keepdims=True)

    o_ref[...] = (first + second).astype(o_ref.dtype)


def _round_up(n, m):
    return -(-n // m) * m


def fm_forward(x, w0, w1, w2, *, max_tb=1024, vmem_budget_bytes=8 * 1024 * 1024):
    """x: (B, F); w0: (1,); w1: (F, 1); w2: (F, L). Returns (B, 1) float32."""
    B, F = x.shape
    L = w2.shape[1]

    # Batch tile: lane-dense (multiple of 128), capped so the double-buffered
    # x^T tile fits a conservative VMEM budget on every TPU generation
    # (v7x has 64 MiB / 32 MiB scoped; staying <8 MiB needs no vmem_limit bump).
    tb = min(max_tb, _round_up(B, 128))
    itemsize = jnp.dtype(x.dtype).itemsize
    while tb > 128 and 2 * F * tb * itemsize > vmem_budget_bytes:
        tb -= 128
    b_pad = _round_up(B, tb)   # ragged batches handled by zero padding

    # Layout plumbing in the wrapper: put batch on the lane axis and hoist the
    # loop-invariant w2^2 / transposes out of the per-tile body.
    xt = jnp.pad(x, ((0, b_pad - B), (0, 0))).T          # (F, B_pad)
    w2t = w2.T                                            # (L, F)
    w2t_sq = w2t * w2t                                    # (L, F), hoisted
    w0 = w0.reshape((1,)).astype(jnp.float32)

    out = pl.pallas_call(
        fm_kernel,
        out_shape=jax.ShapeDtypeStruct((1, b_pad), jnp.float32),
        grid_spec=pltpu.PrefetchScalarGridSpec(
            num_scalar_prefetch=0,
            grid=(b_pad // tb,),
            in_specs=[
                pl.BlockSpec(memory_space=pltpu.MemorySpace.SMEM),  # w0 scalar
                pl.BlockSpec((F, 1), lambda i: (0, 0)),             # w1 (resident)
                pl.BlockSpec((L, F), lambda i: (0, 0)),             # w2^T (resident)
                pl.BlockSpec((L, F), lambda i: (0, 0)),             # (w2^2)^T (resident)
                pl.BlockSpec((F, tb), lambda i: (0, i)),            # x^T batch tile
            ],
            out_specs=pl.BlockSpec((1, tb), lambda i: (0, i)),      # lane-dense
        ),
        compiler_params=pltpu.CompilerParams(
            dimension_semantics=("parallel",)),   # batch axis shards across TCs
    )(w0, w1, w2t, w2t_sq, xt)

    return out[0, :B].reshape(B, 1)


def fm_reference(x, w0, w1, w2):
    first = w0[0] + x @ w1
    second = 0.5 * jnp.sum((x @ w2) ** 2 - (x ** 2) @ (w2 ** 2),
                           axis=1, keepdims=True)
    return first + second


if __name__ == "__main__":
    # Small shapes consistent with the module: fea_num features per sample,
    # latent_dim-dimensional factor vectors.
    batch, fea_num, latent_dim = 16, 32, 16

    key = jax.random.PRNGKey(0)
    kx, k1, k2 = jax.random.split(key, 3)

    # Deterministic parameter init mirroring the PyTorch __init__:
    #   w0 = zeros([1]);  w1 = rand([fea_num, 1]);  w2 = rand([fea_num, latent_dim])
    w0 = jnp.zeros((1,), dtype=jnp.float32)
    w1 = jax.random.uniform(k1, (fea_num, 1), dtype=jnp.float32)
    w2 = jax.random.uniform(k2, (fea_num, latent_dim), dtype=jnp.float32)

    x = jax.random.normal(kx, (batch, fea_num), dtype=jnp.float32)

    out = fm_forward(x, w0, w1, w2)
    out = jax.block_until_ready(out)

    ref = fm_reference(x, w0, w1, w2)
    assert out.shape == (batch, 1)
    assert jnp.allclose(out, ref, atol=1e-4, rtol=1e-4), (
        f"max abs err {jnp.max(jnp.abs(out - ref))}")

    print("KERNEL_OK")
</pallas_src>

<mosaic_0001>
module attributes {stable_mosaic.version = 11 : i64} {
  func.func @fm_kernel(%arg0: i32, %arg1: memref<1xf32, #tpu.memory_space<smem>>, %arg2: memref<32x1xf32, #tpu.memory_space<vmem>>, %arg3: memref<16x32xf32, #tpu.memory_space<vmem>>, %arg4: memref<16x32xf32, #tpu.memory_space<vmem>>, %arg5: memref<32x128xf32, #tpu.memory_space<vmem>>, %arg6: memref<1x128xf32, #tpu.memory_space<vmem>>) attributes {dimension_semantics = [#tpu.dimension_semantics<parallel>], iteration_bounds = array<i64: 1>, scalar_prefetch = 0 : i64, scratch_operands = 0 : i64, tpu.core_type = #tpu.core_type<tc>, window_params = [{transform_indices = @transform_0, window_bounds = array<i64: 1>}, {pipeline_mode = #tpu.pipeline_mode<synchronous>, transform_indices = @transform_1, window_bounds = array<i64: 32, 1>}, {pipeline_mode = #tpu.pipeline_mode<synchronous>, transform_indices = @transform_2, window_bounds = array<i64: 16, 32>}, {pipeline_mode = #tpu.pipeline_mode<synchronous>, transform_indices = @transform_3, window_bounds = array<i64: 16, 32>}, {transform_indices = @transform_4, window_bounds = array<i64: 32, 128>}, {transform_indices = @transform_5, window_bounds = array<i64: 1, 128>}]} {
    %c0 = arith.constant 0 : index
    %c0_0 = arith.constant 0 : index
    %0 = vector.load %arg5[%c0, %c0_0] : memref<32x128xf32, #tpu.memory_space<vmem>>, vector<32x128xf32>
    %c0_1 = arith.constant 0 : index
    %c0_2 = arith.constant 0 : index
    %1 = vector.load %arg2[%c0_1, %c0_2] : memref<32x1xf32, #tpu.memory_space<vmem>>, vector<32x1xf32>
    %c0_3 = arith.constant 0 : index
    %2 = memref.load %arg1[%c0_3] : memref<1xf32, #tpu.memory_space<smem>>
    %3 = vector.broadcast %1 : vector<32x1xf32> to vector<32x128xf32>
    %4 = arith.mulf %0, %3 : vector<32x128xf32>
    %cst = arith.constant dense<0.000000e+00> : vector<128xf32>
    %5 = vector.multi_reduction <add>, %4, %cst [0] : vector<32x128xf32> to vector<128xf32>
    %6 = vector.shape_cast %5 : vector<128xf32> to vector<1x128xf32>
    %7 = vector.broadcast %2 : f32 to vector<1x128xf32>
    %8 = arith.addf %6, %7 : vector<1x128xf32>
    %c0_4 = arith.constant 0 : index
    %c0_5 = arith.constant 0 : index
    %9 = vector.load %arg3[%c0_4, %c0_5] : memref<16x32xf32, #tpu.memory_space<vmem>>, vector<16x32xf32>
    %cst_6 = arith.constant dense<0.000000e+00> : vector<16x128xf32>
    %10 = tpu.matmul %9, %0, %cst_6 {dimension_numbers = #tpu.dot_dimension_numbers<[1], [0], [0], [1], [0, 0, 1, 1], [], []>} : vector<16x32xf32>, vector<32x128xf32>, vector<16x128xf32> -> vector<16x128xf32>
    %c0_7 = arith.constant 0 : index
    %c0_8 = arith.constant 0 : index
    %11 = vector.load %arg4[%c0_7, %c0_8] : memref<16x32xf32, #tpu.memory_space<vmem>>, vector<16x32xf32>
    %12 = arith.mulf %0, %0 : vector<32x128xf32>
    %cst_9 = arith.constant dense<0.000000e+00> : vector<16x128xf32>
    %13 = tpu.matmul %11, %12, %cst_9 {dimension_numbers = #tpu.dot_dimension_numbers<[1], [0], [0], [1], [0, 0, 1, 1], [], []>} : vector<16x32xf32>, vector<32x128xf32>, vector<16x128xf32> -> vector<16x128xf32>
    %14 = arith.mulf %10, %10 : vector<16x128xf32>
    %15 = arith.subf %14, %13 : vector<16x128xf32>
    %cst_10 = arith.constant dense<0.000000e+00> : vector<128xf32>
    %16 = vector.multi_reduction <add>, %15, %cst_10 [0] : vector<16x128xf32> to vector<128xf32>
    %17 = vector.shape_cast %16 : vector<128xf32> to vector<1x128xf32>
    %cst_11 = arith.constant 5.000000e-01 : f32
    %18 = vector.broadcast %cst_11 : f32 to vector<1x128xf32>
    %19 = arith.mulf %18, %17 : vector<1x128xf32>
    %20 = arith.addf %8, %19 : vector<1x128xf32>
    %c0_12 = arith.constant 0 : index
    %c0_13 = arith.constant 0 : index
    %21 = vector.load %arg6[%c0_12, %c0_13] : memref<1x128xf32, #tpu.memory_space<vmem>>, vector<1x128xf32>
    tpu.vector_store %arg6[%c0_12, %c0_13], %20 {strides = array<i32>} : memref<1x128xf32, #tpu.memory_space<vmem>>, vector<1x128xf32>,
    return
  }
  func.func @transform_0(%arg0: i32) -> i32 {
    %c0_i32 = arith.constant 0 : i32
    %c0_i32_0 = arith.constant 0 : i32
    return %c0_i32 : i32
  }
  func.func @transform_1(%arg0: i32) -> (i32, i32) {
    %c0_i32 = arith.constant 0 : i32
    %c0_i32_0 = arith.constant 0 : i32
    %c0_i32_1 = arith.constant 0 : i32
    return %c0_i32, %c0_i32_0 : i32, i32
  }
  func.func @transform_2(%arg0: i32) -> (i32, i32) {
    %c0_i32 = arith.constant 0 : i32
    %c0_i32_0 = arith.constant 0 : i32
    %c0_i32_1 = arith.constant 0 : i32
    return %c0_i32, %c0_i32_0 : i32, i32
  }
  func.func @transform_3(%arg0: i32) -> (i32, i32) {
    %c0_i32 = arith.constant 0 : i32
    %c0_i32_0 = arith.constant 0 : i32
    %c0_i32_1 = arith.constant 0 : i32
    return %c0_i32, %c0_i32_0 : i32, i32
  }
  func.func @transform_4(%arg0: i32) -> (i32, i32) {
    %c0_i32 = arith.constant 0 : i32
    %c0_i32_0 = arith.constant 0 : i32
    return %c0_i32, %arg0 : i32, i32
  }
  func.func @transform_5(%arg0: i32) -> (i32, i32) {
    %c0_i32 = arith.constant 0 : i32
    %c0_i32_0 = arith.constant 0 : i32
    return %c0_i32, %arg0 : i32, i32
  }
}

</mosaic_0001>

<llo_original>
// kernel: tpu_custom_call.1
$region0: #{tpu_custom_call.1}
  #allocation0 [shape = 'u32[]', space=smem, size = 0x4, offset = 0x4, fixed_abs, tag = 'smem constant byte address 0x4 - core index']
  #allocation1 [shape = 'u32[144,128]{1,0:T(1,128)}', space=vmem, size = 0x12000, scoped, tag = 'internal scratch']
  #allocation2 [shape = 'f32[1]{0:T(128)S(6)}', space=smem, size = 0x200, scoped, tag = 'scoped memory for tpu_custom_call.1']
  %s0 = inlined_call_operand.<no memory space> [shape: f32[1], index: 0, kind: input, shape index: {}]
  %s1 = inlined_call_operand.vmem [shape: f32[32,1], index: 1, kind: input, shape index: {}]
  %s2 = inlined_call_operand.vmem [shape: f32[16,32], index: 2, kind: input, shape index: {}]
  %s3 = inlined_call_operand.hbm [shape: f32[16,32], index: 3, kind: input, shape index: {}]
  %s4 = inlined_call_operand.vmem [shape: f32[32,128], index: 4, kind: input, shape index: {}]
  %s5 = inlined_call_operand.hbm [shape: f32[1,128], index: 5, kind: output, shape index: {}]
  %s6 = sld [smem:[#allocation0]]
  $region34: #{tpu_custom_call.1} parent=0
    _
  %s8 = ssub.s32 1, %s6
  %s9 = scalar_select 0, %s8, %s6
  %10 = sst [smem:[#allocation2]] %s0
  $region1: #{tpu_custom_call.1} parent=0
    #allocation3 [shape = 'u8[8192]{0}', space=vmem, size = 0x2000, scoped, tag = 'input window, operand 3, single buffered']
    #allocation4 [shape = 's32[1]{0}', space=sflag, size = 0x4, scoped, tag = 'scoped memory for tpu_custom_call.1']
    #allocation5 [shape = 's32[1]{0}', space=sflag, size = 0x4, scoped, tag = 'scoped memory for tpu_custom_call.1']
    #allocation6 [shape = 'u8[512]{0}', space=vmem, size = 0x400, scoped, tag = 'output window, operand 0, single buffered']
    %11 = vsyncpa [#allocation4], 0
    %12 = vsyncpa [#allocation5], 0
    // Predicated region
    $region2: #{tpu_custom_call.1} parent=1 // pred_check
      _
    $region3: #{tpu_custom_call.1} parent=1 // pred_check_branch
      %14 = sbr.rel (0) target = $region5
    $region4: #{tpu_custom_call.1} parent=1 // pred_region
      _
    $region5: #{tpu_custom_call.1} parent=1 // pred_fallthru
      _
    // Predicated region
    $region6: #{tpu_custom_call.1} parent=1 // pred_check
      _
    $region7: #{tpu_custom_call.1} parent=1 // pred_check_branch
      %16 = sbr.rel (0) target = $region9
    $region8: #{tpu_custom_call.1} parent=1 // pred_region
      _
    $region9: #{tpu_custom_call.1} parent=1 // pred_fallthru
      _
    // Predicated region
    $region10: #{tpu_custom_call.1} parent=1 // pred_check
      _
    $region11: #{tpu_custom_call.1} parent=1 // pred_check_branch
      %18 = sbr.rel (0) target = $region13
    $region12: #{tpu_custom_call.1} parent=1 // pred_region
      _
    $region13: #{tpu_custom_call.1} parent=1 // pred_fallthru
      _
    // Predicated region
    $region14: #{tpu_custom_call.1} parent=1 // pred_check
      _
    $region15: #{tpu_custom_call.1} parent=1 // pred_check_branch
      %20 = sbr.rel (0) target = $region17
    $region16: #{tpu_custom_call.1} parent=1 // pred_region
      %s22 = ssub.s32 256, 256
      %23 = vsyncadd [#allocation4], %s22
      %s24 = sshll.u32 [#allocation3], 4
      %s25 = int_to_ptr.vmem [resolvable:$true] %s24
      %30 = dma.hbm_to_vmem [thread:$0]  %s3, 256, %s25, [#allocation4], 128, 128, 8
    $region17: #{tpu_custom_call.1} parent=1 // pred_fallthru
      _
    // Predicated region
    $region18: #{tpu_custom_call.1} parent=1 // pred_check
      _
    $region19: #{tpu_custom_call.1} parent=1 // pred_check_branch
      %32 = sbr.rel (0) target = $region21
    $region20: #{tpu_custom_call.1} parent=1 // pred_region
      _
    $region21: #{tpu_custom_call.1} parent=1 // pred_fallthru
      _
    // Predicated region
    $region22: #{tpu_custom_call.1} parent=1 // pred_check
      _
    $region23: #{tpu_custom_call.1} parent=1 // pred_check_branch
      %34 = sbr.rel (0) target = $region25
    $region24: #{tpu_custom_call.1} parent=1 // pred_region
      %35 = dma.done [#allocation4], 256
    $region25: #{tpu_custom_call.1} parent=1 // pred_fallthru
      _
    %v36 = vld [vmem:[%s4] sm:$0xff]
    %v37 = vld [vmem:[%s4 + $0x8] sm:$0xff]
    %v38 = vld [vmem:[%s4 + $0x10] sm:$0xff]
    %v39 = vld [vmem:[%s4 + $0x18] sm:$0xff]
    %v40 = vld [vmem:[%s1] sm:$0xff]
    %v41 = vld [vmem:[%s1 + $0x8] sm:$0xff]
    %v42 = vld [vmem:[%s1 + $0x10] sm:$0xff]
    %v43 = vld [vmem:[%s1 + $0x18] sm:$0xff]
    %s44 = sld [smem:[#allocation2]]
    %46 = vset.pattern.permute.xlu0 0
    %47 = vperm.xlu0 %46, %v40
    %v48 = vpop.permute.xlu0 %47
    %51 = vset.pattern.permute.xlu0 0
    %52 = vperm.xlu0 %51, %v41
    %v53 = vpop.permute.xlu0 %52
    %56 = vset.pattern.permute.xlu0 0
    %57 = vperm.xlu0 %56, %v42
    %v58 = vpop.permute.xlu0 %57
    %61 = vset.pattern.permute.xlu0 0
    %62 = vperm.xlu0 %61, %v43
    %v63 = vpop.permute.xlu0 %62
    %v65 = vmul.f32 %v36, %v48
    %v66 = vmul.f32 %v37, %v53
    %v67 = vmul.f32 %v38, %v58
    %v68 = vmul.f32 %v39, %v63
    %v69 = vadd.f32 %v65, %v66
    %v70 = vadd.f32 %v69, %v67
    %v71 = vadd.f32 %v70, %v68
    %v72 = vrot.slane %v71, 4
    %v73 = vadd.f32 %v71, %v72
    %v74 = vrot.slane %v73, 2
    %v75 = vadd.f32 %v73, %v74
    %v76 = vrot.slane %v75, 1
    %v77 = vadd.f32 %v75, %v76
    %v78 = vstv %s44
    %v79 = vadd.f32 %v77, %v78
    %v80 = vld [vmem:[%s2] sm:$0xff]
    %v81 = vld [vmem:[%s2 + $0x8] sm:$0xff]
    %vm82 = vcmask 261120
    %v84 = vsel %vm82, %v80, 0
    %v87 = vsel %vm82, %v81, 0
    %89 = vmatprep.subr.mxu0 0.0
    %90 = vmatpush1.msra.mxu0 %v36
    %91 = vmatprep.subr.mxu0 0.0
    %92 = vmatpush1.msra.mxu0 %v37
    %93 = vmatprep.subr.mxu0 0.0
    %94 = vmatpush1.msra.mxu0 %v38
    %95 = vmatprep.subr.mxu0 0.0
    %96 = vmatpush1.msra.mxu0 %v39
    %97 = vmatprep.subr.mxu0 0.0
    %98 = vmatpush1.msra.mxu0 0.0
    %99 = vmatprep.subr.mxu0 0.0
    %100 = vmatpush1.msra.mxu0 0.0
    %101 = vmatprep.subr.mxu0 0.0
    %102 = vmatpush1.msra.mxu0 0.0
    %103 = vmatprep.subr.mxu0 0.0
    %104 = vmatpush1.msra.mxu0 0.0
    %105 = vmatprep.subr.mxu0 0.0
    %106 = vmatpush1.msra.mxu0 0.0
    %107 = vmatprep.subr.mxu0 0.0
    %108 = vmatpush1.msra.mxu0 0.0
    %109 = vmatprep.subr.mxu0 0.0
    %110 = vmatpush1.msra.mxu0 0.0
    %111 = vmatprep.subr.mxu0 0.0
    %112 = vmatpush1.msra.mxu0 0.0
    %113 = vmatprep.subr.mxu0 0.0
    %114 = vmatpush1.msra.mxu0 0.0
    %115 = vmatprep.subr.mxu0 0.0
    %116 = vmatpush1.msra.mxu0 0.0
    %117 = vmatprep.subr.mxu0 0.0
    %118 = vmatpush1.msra.mxu0 0.0
    %119 = vmatprep.subr.mxu0 0.0
    %120 = vmatpush1.msra.mxu0 0.0
    %121 = vmatprep.subr.mxu0 0.0
    %122 = vmatpush1.msra.mxu0 0.0
    %123 = vmatprep.subr.mxu0 0.0
    %124 = vmatpush1.msra.mxu0 0.0
    %125 = vmatprep.subr.mxu0 0.0
    %126 = vmatpush1.msra.mxu0 0.0
    %127 = vmatprep.subr.mxu0 0.0
    %128 = vmatpush1.msra.mxu0 0.0
    %129 = vmatprep.subr.mxu0 0.0
    %130 = vmatpush1.msra.mxu0 0.0
    %131 = vmatprep.subr.mxu0 0.0
    %132 = vmatpush1.msra.mxu0 0.0
    %133 = vmatprep.subr.mxu0 0.0
    %134 = vmatpush1.msra.mxu0 0.0
    %135 = vmatprep.subr.mxu0 0.0
    %136 = vmatpush1.msra.mxu0 0.0
    %137 = vmatprep.subr.mxu0 0.0
    %138 = vmatpush1.msra.mxu0 0.0
    %139 = vmatprep.subr.mxu0 0.0
    %140 = vmatpush1.msra.mxu0 0.0
    %141 = vmatprep.subr.mxu0 0.0
    %142 = vmatpush1.msra.mxu0 0.0
    %143 = vmatprep.subr.mxu0 0.0
    %144 = vmatpush1.msra.mxu0 0.0
    %145 = vmatprep.subr.mxu0 0.0
    %146 = vmatpush1.msra.mxu0 0.0
    %147 = vmatprep.subr.mxu0 0.0
    %148 = vmatpush1.msra.mxu0 0.0
    %149 = vmatprep.subr.mxu0 0.0
    %150 = vmatpush1.msra.mxu0 0.0
    %151 = vmatprep.subr.mxu0 0.0
    %152 = vmatpush1.msra.mxu0 0.0
    %153 = vmatprep.mubr.f32.mxu0 0.0
    %154 = vmatmul.mubr.f32.gmra.mrb[0].mxu0 %v84
    %v155 = vpop.f32.mrb[0].mxu0
    %v156 = vadd.f32 0.0, %v155
    %v157 = vpop.f32.mrb[0].mxu0
    %158 = vmatprep.mubr.f32.mxu0 0.0
    %159 = vmatmul.mubr.f32.gmra.mrb[0].mxu0 %v87
    %v160 = vpop.f32.mrb[0].mxu0
    %v161 = vadd.f32 0.0, %v160
    %v162 = vpop.f32.mrb[0].mxu0
    %163 = vdwg.mxu0
    %v164 = vld [vmem:[#allocation3] sm:$0xff]
    %v165 = vld [vmem:[#allocation3 + $0x8] sm:$0xff]
    %v166 = vmul.f32 %v36, %v36
    %v167 = vmul.f32 %v37, %v37
    %v168 = vmul.f32 %v38, %v38
    %v169 = vmul.f32 %v39, %v39
    %v171 = vsel %vm82, %v164, 0
    %v174 = vsel %vm82, %v165, 0
    %176 = vmatprep.subr.mxu0 0.0
    %177 = vmatpush1.msra.mxu0 %v166
    %178 = vmatprep.subr.mxu0 0.0
    %179 = vmatpush1.msra.mxu0 %v167
    %180 = vmatprep.subr.mxu0 0.0
    %181 = vmatpush1.msra.mxu0 %v168
    %182 = vmatprep.subr.mxu0 0.0
    %183 = vmatpush1.msra.mxu0 %v169
    %184 = vmatprep.subr.mxu0 0.0
    %185 = vmatpush1.msra.mxu0 0.0
    %186 = vmatprep.subr.mxu0 0.0
    %187 = vmatpush1.msra.mxu0 0.0
    %188 = vmatprep.subr.mxu0 0.0
    %189 = vmatpush1.msra.mxu0 0.0
    %190 = vmatprep.subr.mxu0 0.0
    %191 = vmatpush1.msra.mxu0 0.0
    %192 = vmatprep.subr.mxu0 0.0
    %193 = vmatpush1.msra.mxu0 0.0
    %194 = vmatprep.subr.mxu0 0.0
    %195 = vmatpush1.msra.mxu0 0.0
    %196 = vmatprep.subr.mxu0 0.0
    %197 = vmatpush1.msra.mxu0 0.0
    %198 = vmatprep.subr.mxu0 0.0
    %199 = vmatpush1.msra.mxu0 0.0
    %200 = vmatprep.subr.mxu0 0.0
    %201 = vmatpush1.msra.mxu0 0.0
    %202 = vmatprep.subr.mxu0 0.0
    %203 = vmatpush1.msra.mxu0 0.0
    %204 = vmatprep.subr.mxu0 0.0
    %205 = vmatpush1.msra.mxu0 0.0
    %206 = vmatprep.subr.mxu0 0.0
    %207 = vmatpush1.msra.mxu0 0.0
    %208 = vmatprep.subr.mxu0 0.0
    %209 = vmatpush1.msra.mxu0 0.0
    %210 = vmatprep.subr.mxu0 0.0
    %211 = vmatpush1.msra.mxu0 0.0
    %212 = vmatprep.subr.mxu0 0.0
    %213 = vmatpush1.msra.mxu0 0.0
    %214 = vmatprep.subr.mxu0 0.0
    %215 = vmatpush1.msra.mxu0 0.0
    %216 = vmatprep.subr.mxu0 0.0
    %217 = vmatpush1.msra.mxu0 0.0
    %218 = vmatprep.subr.mxu0 0.0
    %219 = vmatpush1.msra.mxu0 0.0
    %220 = vmatprep.subr.mxu0 0.0
    %221 = vmatpush1.msra.mxu0 0.0
    %222 = vmatprep.subr.mxu0 0.0
    %223 = vmatpush1.msra.mxu0 0.0
    %224 = vmatprep.subr.mxu0 0.0
    %225 = vmatpush1.msra.mxu0 0.0
    %226 = vmatprep.subr.mxu0 0.0
    %227 = vmatpush1.msra.mxu0 0.0
    %228 = vmatprep.subr.mxu0 0.0
    %229 = vmatpush1.msra.mxu0 0.0
    %230 = vmatprep.subr.mxu0 0.0
    %231 = vmatpush1.msra.mxu0 0.0
    %232 = vmatprep.subr.mxu0 0.0
    %233 = vmatpush1.msra.mxu0 0.0
    %234 = vmatprep.subr.mxu0 0.0
    %235 = vmatpush1.msra.mxu0 0.0
    %236 = vmatprep.subr.mxu0 0.0
    %237 = vmatpush1.msra.mxu0 0.0
    %238 = vmatprep.subr.mxu0 0.0
    %239 = vmatpush1.msra.mxu0 0.0
    %240 = vmatprep.mubr.f32.mxu0 0.0
    %241 = vmatmul.mubr.f32.gmra.mrb[0].mxu0 %v171
    %v242 = vpop.f32.mrb[0].mxu0
    %v243 = vadd.f32 0.0, %v242
    %v244 = vpop.f32.mrb[0].mxu0
    %245 = vmatprep.mubr.f32.mxu0 0.0
    %246 = vmatmul.mubr.f32.gmra.mrb[0].mxu0 %v174
    %v247 = vpop.f32.mrb[0].mxu0
    %v248 = vadd.f32 0.0, %v247
    %v249 = vpop.f32.mrb[0].mxu0
    %250 = vdwg.mxu0
    %v251 = vmul.f32 %v156, %v156
    %v252 = vmul.f32 %v161, %v161
    %v253 = vsub.f32 %v251, %v243
    %v254 = vsub.f32 %v252, %v248
    %v255 = vadd.f32 %v253, %v254
    %v256 = vrot.slane %v255, 4
    %v257 = vadd.f32 %v255, %v256
    %v258 = vrot.slane %v257, 2
    %v259 = vadd.f32 %v257, %v258
    %v260 = vrot.slane %v259, 1
    %v261 = vadd.f32 %v259, %v260
    %v262 = vmul.f32 %v261, 0.5
    %v263 = vadd.f32 %v79, %v262
    %264 = vst [vmem:[#allocation6] sm:$0x1] %v263
    // Predicated region
    $region26: #{tpu_custom_call.1} parent=1 // pred_check
      _
    $region27: #{tpu_custom_call.1} parent=1 // pred_check_branch
      %266 = sbr.rel (0) target = $region29
    $region28: #{tpu_custom_call.1} parent=1 // pred_region
      %s268 = ssub.s32 16, 16
      %269 = vsyncadd [#allocation5], %s268
      %s271 = sshll.u32 [#allocation6], 4
      %s272 = int_to_ptr.vmem [resolvable:$true] %s271
      %274 = dma.vmem_to_hbm [thread:$0]  %s272, 16, %s5, [#allocation5]
    $region29: #{tpu_custom_call.1} parent=1 // pred_fallthru
      _
    // Predicated region
    $region30: #{tpu_custom_call.1} parent=1 // pred_check
      _
    $region31: #{tpu_custom_call.1} parent=1 // pred_check_branch
      %276 = sbr.rel (0) target = $region33
    $region32: #{tpu_custom_call.1} parent=1 // pred_region
      %277 = dma.done [#allocation5], 16
    $region33: #{tpu_custom_call.1} parent=1 // pred_fallthru
      _
    %278 = vsyncpa [#allocation4], 1
    %279 = vsyncpa [#allocation5], 1

</llo_original>
